<compile_context>
chip_gen: v7x
topology: tpu7x:2x2x1
jax: 0.10.0
libtpu: 0.0.40
codegen_flags: <defaults>
</compile_context>

<pallas_src>
import functools
import math

import jax
import jax.numpy as jnp
from jax.experimental import pallas as pl
from jax.experimental.pallas import tpu as pltpu


def _round_up(a, b):
    return ((a + b - 1) // b) * b


def _mc_relu_dropout_kernel(seed_ref, x_ref, o_ref, *, keep_threshold, inv_keep,
                            cols, block_rows):
    """dropout(relu(x)) with an inverted-dropout scale, stateless PRNG."""
    x = x_ref[...]
    shape = x.shape

    # Global linear element index of every element in this block.
    row0 = pl.program_id(0) * block_rows
    ri = jax.lax.broadcasted_iota(jnp.int32, shape, 0) + row0
    ci = jax.lax.broadcasted_iota(jnp.int32, shape, 1)
    lin = ri * cols + ci

    # Counter-based PRNG: fold the seed into the element index, then apply a
    # 32-bit avalanche hash ("lowbias32").  Fully stateless per element.
    h = lin.astype(jnp.uint32) + seed_ref[0].astype(jnp.uint32) * jnp.uint32(0x9E3779B9)
    h ^= h >> 16
    h *= jnp.uint32(0x7FEB352D)
    h ^= h >> 15
    h *= jnp.uint32(0x846CA68B)
    h ^= h >> 16

    # Keep with probability keep_prob: compare raw bits against a threshold.
    keep = h < jnp.uint32(keep_threshold)

    y = jnp.maximum(x, jnp.zeros((), x.dtype))                       # ReLU (stays in x dtype)
    y = jnp.where(keep, y * jnp.asarray(inv_keep, x.dtype), jnp.zeros((), x.dtype))
    o_ref[...] = y


def mc_relu_dropout(x, seed, dropout=0.1):
    """Pallas implementation of dropout(relu(x), p=dropout, training=True)."""
    assert 0.0 <= dropout < 1.0
    keep_prob = 1.0 - dropout
    # P(uint32 bits < keep_threshold) == keep_prob.
    keep_threshold = min(int(round(keep_prob * 2.0 ** 32)), 2 ** 32 - 1)
    inv_keep = 1.0 / keep_prob

    orig_shape = x.shape
    orig_dtype = x.dtype
    total = math.prod(orig_shape)

    # Lane-dense 2-D slab: wide columns for large tensors, one (8,128)-aligned
    # tile's worth of lanes for small ones.
    cols = 512 if total >= 8 * 512 else 128
    rows = -(-total // cols)
    # Up to 2 MiB f32 blocks; multiples of (8, 128) as required.
    block_rows = min(1024, _round_up(rows, 8))
    padded_rows = _round_up(rows, block_rows)
    padded_total = padded_rows * cols

    flat = x.reshape(-1)
    if padded_total != total:
        # TODO(synk): handle the ragged tail with a masked partial last block
        # instead of a pad copy if this extra HBM pass ever matters.
        flat = jnp.pad(flat, (0, padded_total - total))
    x2d = flat.reshape(padded_rows, cols)

    num_blocks = padded_rows // block_rows
    seed_arr = jnp.asarray([seed], dtype=jnp.int32)

    kernel = functools.partial(
        _mc_relu_dropout_kernel,
        keep_threshold=keep_threshold,
        inv_keep=inv_keep,
        cols=cols,
        block_rows=block_rows,
    )

    out2d = pl.pallas_call(
        kernel,
        out_shape=jax.ShapeDtypeStruct((padded_rows, cols), orig_dtype),
        grid_spec=pltpu.PrefetchScalarGridSpec(
            num_scalar_prefetch=1,            # seed lives in SMEM, no per-step DMA
            grid=(num_blocks,),
            in_specs=[pl.BlockSpec((block_rows, cols), lambda i, seed_ref: (i, 0))],
            out_specs=pl.BlockSpec((block_rows, cols), lambda i, seed_ref: (i, 0)),
        ),
        compiler_params=pltpu.CompilerParams(
            # Stateless per-element PRNG -> grid steps are independent, so the
            # axis can be sharded across both v7x TensorCores.
            dimension_semantics=("parallel",),
        ),
    )(seed_arr, x2d)

    if padded_total == total:
        return out2d.reshape(orig_shape)
    return out2d.reshape(-1)[:total].reshape(orig_shape)


if __name__ == "__main__":
    key = jax.random.PRNGKey(0)
    # Small NCHW activation tensor.
    x = jax.random.normal(key, (2, 4, 16, 16), dtype=jnp.float32)

    dropout_p = 0.1
    out = mc_relu_dropout(x, seed=1234, dropout=dropout_p)
    out = jax.block_until_ready(out)

    # Sanity checks on the MC-dropout-of-ReLU semantics.
    assert out.shape == x.shape and out.dtype == x.dtype
    relu_x = jnp.maximum(x, 0.0)
    scaled = relu_x / (1.0 - dropout_p)
    # Every output element is either 0 (dropped / relu-zeroed) or relu(x)/keep_prob (kept).
    is_zero = jnp.isclose(out, 0.0)
    is_kept = jnp.isclose(out, scaled, rtol=1e-5, atol=1e-6)
    assert bool(jnp.all(is_zero | is_kept))
    # Roughly the right fraction of surviving positive activations (~0.9).
    pos = relu_x > 0
    kept_frac = jnp.sum((out != 0) & pos) / jnp.maximum(jnp.sum(pos), 1)
    assert 0.75 < float(kept_frac) < 1.0

    print("KERNEL_OK")
</pallas_src>

<mosaic_0001>
module attributes {stable_mosaic.version = 11 : i64} {
  func.func @_mc_relu_dropout_kernel(%arg0: i32, %arg1: memref<1xi32, #tpu.memory_space<smem>>, %arg2: memref<16x128xf32, #tpu.memory_space<vmem>>, %arg3: memref<16x128xf32, #tpu.memory_space<vmem>>) attributes {dimension_semantics = [#tpu.dimension_semantics<parallel>], iteration_bounds = array<i64: 1>, scalar_prefetch = 1 : i64, scratch_operands = 0 : i64, tpu.core_type = #tpu.core_type<tc>, window_params = [{transform_indices = @transform_0, window_bounds = array<i64: 16, 128>}, {transform_indices = @transform_1, window_bounds = array<i64: 16, 128>}]} {
    %c0 = arith.constant 0 : index
    %c0_0 = arith.constant 0 : index
    %0 = vector.load %arg2[%c0, %c0_0] : memref<16x128xf32, #tpu.memory_space<vmem>>, vector<16x128xf32>
    %c16_i32 = arith.constant 16 : i32
    %1 = arith.muli %arg0, %c16_i32 : i32
    %2 = tpu.iota {dimensions = array<i32: 0>} : vector<16x128xi32>
    %3 = vector.broadcast %1 : i32 to vector<16x128xi32>
    %4 = arith.addi %2, %3 : vector<16x128xi32>
    %5 = tpu.iota {dimensions = array<i32: 1>} : vector<16x128xi32>
    %c128_i32 = arith.constant 128 : i32
    %6 = vector.broadcast %c128_i32 : i32 to vector<16x128xi32>
    %7 = arith.muli %4, %6 : vector<16x128xi32>
    %8 = arith.addi %7, %5 : vector<16x128xi32>
    %c0_1 = arith.constant 0 : index
    %9 = memref.load %arg1[%c0_1] : memref<1xi32, #tpu.memory_space<smem>>
    %c-1640531527_i32 = arith.constant -1640531527 : i32
    %10 = arith.muli %9, %c-1640531527_i32 : i32
    %11 = vector.broadcast %10 : i32 to vector<16x128xi32>
    %12 = arith.addi %8, %11 : vector<16x128xi32>
    %c16_i32_2 = arith.constant 16 : i32
    %13 = vector.broadcast %c16_i32_2 : i32 to vector<16x128xi32>
    %14 = arith.shrui %12, %13 : vector<16x128xi32>
    %15 = arith.xori %12, %14 : vector<16x128xi32>
    %c2146121005_i32 = arith.constant 2146121005 : i32
    %16 = vector.broadcast %c2146121005_i32 : i32 to vector<16x128xi32>
    %17 = arith.muli %15, %16 : vector<16x128xi32>
    %c15_i32 = arith.constant 15 : i32
    %18 = vector.broadcast %c15_i32 : i32 to vector<16x128xi32>
    %19 = arith.shrui %17, %18 : vector<16x128xi32>
    %20 = arith.xori %17, %19 : vector<16x128xi32>
    %c-2073254261_i32 = arith.constant -2073254261 : i32
    %21 = vector.broadcast %c-2073254261_i32 : i32 to vector<16x128xi32>
    %22 = arith.muli %20, %21 : vector<16x128xi32>
    %c16_i32_3 = arith.constant 16 : i32
    %23 = vector.broadcast %c16_i32_3 : i32 to vector<16x128xi32>
    %24 = arith.shrui %22, %23 : vector<16x128xi32>
    %25 = arith.xori %22, %24 : vector<16x128xi32>
    %c-429496730_i32 = arith.constant -429496730 : i32
    %26 = vector.broadcast %c-429496730_i32 : i32 to vector<16x128xi32>
    %27 = arith.cmpi ult, %25, %26 : vector<16x128xi32>
    %cst = arith.constant 0.000000e+00 : f32
    %28 = vector.broadcast %cst : f32 to vector<16x128xf32>
    %29 = arith.maximumf %0, %28 : vector<16x128xf32>
    %cst_4 = arith.constant 1.11111116 : f32
    %30 = vector.broadcast %cst_4 : f32 to vector<16x128xf32>
    %31 = arith.mulf %29, %30 : vector<16x128xf32>
    %cst_5 = arith.constant 0.000000e+00 : f32
    %32 = vector.broadcast %cst_5 : f32 to vector<16x128xf32>
    %33 = arith.select %27, %31, %32 : vector<16x128xi1>, vector<16x128xf32>
    %c0_6 = arith.constant 0 : index
    %c0_7 = arith.constant 0 : index
    %34 = vector.load %arg3[%c0_6, %c0_7] : memref<16x128xf32, #tpu.memory_space<vmem>>, vector<16x128xf32>
    tpu.vector_store %arg3[%c0_6, %c0_7], %33 {strides = array<i32>} : memref<16x128xf32, #tpu.memory_space<vmem>>, vector<16x128xf32>,
    return
  }
  func.func @transform_0(%arg0: i32, %arg1: memref<1xi32, #tpu.memory_space<smem>>) -> (i32, i32) {
    %c0_i32 = arith.constant 0 : i32
    %c0_i32_0 = arith.constant 0 : i32
    return %arg0, %c0_i32 : i32, i32
  }
  func.func @transform_1(%arg0: i32, %arg1: memref<1xi32, #tpu.memory_space<smem>>) -> (i32, i32) {
    %c0_i32 = arith.constant 0 : i32
    %c0_i32_0 = arith.constant 0 : i32
    return %arg0, %c0_i32 : i32, i32
  }
}

</mosaic_0001>

<llo_original>
// kernel: tpu_custom_call.1
$region0: #{tpu_custom_call.1}
  #allocation0 [shape = 'u32[]', space=smem, size = 0x4, offset = 0x4, fixed_abs, tag = 'smem constant byte address 0x4 - core index']
  #allocation1 [shape = 'u32[144,128]{1,0:T(1,128)}', space=vmem, size = 0x12000, scoped, tag = 'internal scratch']
  #allocation2 [shape = 's32[1]{0}', space=sflag, size = 0x4, scoped, tag = 'scoped memory for tpu_custom_call.1']
  #allocation3 [shape = 's32[1]{0:T(128)S(6)}', space=smem, size = 0x200, scoped, tag = 'prefetched SMEM operand 0']
  %s0 = inlined_call_operand.<no memory space> [shape: s32[1], index: 0, kind: input, shape index: {}]
  %s1 = inlined_call_operand.hbm [shape: f32[16,128], index: 1, kind: input, shape index: {}]
  %s2 = inlined_call_operand.hbm [shape: f32[16,128], index: 2, kind: output, shape index: {}]
  %s3 = sld [smem:[#allocation0]]
  $region18: #{tpu_custom_call.1} parent=0
    _
  %s5 = ssub.s32 1, %s3
  %s6 = scalar_select 0, %s5, %s3
  %7 = sst [smem:[#allocation3]] %s0
  $region1: #{tpu_custom_call.1} parent=0
    #allocation4 [shape = 'u8[8192]{0}', space=vmem, size = 0x2000, scoped, tag = 'input window, operand 1, single buffered']
    #allocation5 [shape = 's32[1]{0}', space=sflag, size = 0x4, scoped, tag = 'scoped memory for tpu_custom_call.1']
    #allocation6 [shape = 's32[1]{0}', space=sflag, size = 0x4, scoped, tag = 'scoped memory for tpu_custom_call.1']
    #allocation7 [shape = 'u8[8192]{0}', space=vmem, size = 0x2000, scoped, tag = 'output window, operand 0, single buffered']
    %8 = vsyncpa [#allocation5], 0
    %9 = vsyncpa [#allocation6], 0
    // Predicated region
    $region2: #{tpu_custom_call.1} parent=1 // pred_check
      _
    $region3: #{tpu_custom_call.1} parent=1 // pred_check_branch
      %11 = sbr.rel (0) target = $region5
    $region4: #{tpu_custom_call.1} parent=1 // pred_region
      %s13 = ssub.s32 256, 256
      %14 = vsyncadd [#allocation5], %s13
      %s15 = sshll.u32 [#allocation4], 4
      %s16 = int_to_ptr.vmem [resolvable:$true] %s15
      %21 = dma.hbm_to_vmem [thread:$0]  %s1, 256, %s16, [#allocation5], 128, 128, 8
    $region5: #{tpu_custom_call.1} parent=1 // pred_fallthru
      _
    // Predicated region
    $region6: #{tpu_custom_call.1} parent=1 // pred_check
      _
    $region7: #{tpu_custom_call.1} parent=1 // pred_check_branch
      %23 = sbr.rel (0) target = $region9
    $region8: #{tpu_custom_call.1} parent=1 // pred_region
      %24 = dma.done [#allocation5], 256
    $region9: #{tpu_custom_call.1} parent=1 // pred_fallthru
      _
    %v25 = vld [vmem:[#allocation4] sm:$0xff]
    %v26 = vld [vmem:[#allocation4 + $0x8] sm:$0xff]
    %s27 = smul.u32 0, 16
    %v28 = vlaneseq
    %v29 = vshrl.u32 %v28, 7
    %v30 = vadd.s32 %v29, 8
    %v31 = vstv %s27
    %v32 = vadd.s32 %v29, %v31
    %v33 = vadd.s32 %v30, %v31
    %v34 = vlaneseq
    %v35 = vand.u32 %v34, 127
    %v36 = vmul.u32 %v32, 128
    %v37 = vmul.u32 %v33, 128
    %v38 = vadd.s32 %v36, %v35
    %v39 = vadd.s32 %v37, %v35
    %s40 = sld [smem:[#allocation3]]
    %s41 = smul.u32 %s40, 2654435769
    %v42 = vstv %s41
    %v43 = vadd.s32 %v38, %v42
    %v44 = vadd.s32 %v39, %v42
    %v45 = vshrl.u32 %v43, 16
    %v46 = vshrl.u32 %v44, 16
    %v47 = vxor.u32 %v43, %v45
    %v48 = vxor.u32 %v44, %v46
    %v49 = vmul.u32 %v47, 2146121005
    %v50 = vmul.u32 %v48, 2146121005
    %v51 = vshrl.u32 %v49, 15
    %v52 = vshrl.u32 %v50, 15
    %v53 = vxor.u32 %v49, %v51
    %v54 = vxor.u32 %v50, %v52
    %v55 = vmul.u32 %v53, 2221713035
    %v56 = vmul.u32 %v54, 2221713035
    %v57 = vshrl.u32 %v55, 16
    %v58 = vshrl.u32 %v56, 16
    %v59 = vxor.u32 %v55, %v57
    %v60 = vxor.u32 %v56, %v58
    %vm61 = vcmp.lt.u32.totalorder %v59, 3865470566
    %vm62 = vcmp.lt.u32.totalorder %v60, 3865470566
    %v63 = vmax.f32 %v25, 0.0
    %v64 = vmax.f32 %v26, 0.0
    %v65 = vmul.f32 %v63, 1.1111112
    %v66 = vmul.f32 %v64, 1.1111112
    %v67 = vsel %vm61, %v65, 0.0
    %v68 = vsel %vm62, %v66, 0.0
    %69 = vst [vmem:[#allocation7] sm:$0xff] %v67
    %70 = vst [vmem:[#allocation7 + $0x8] sm:$0xff] %v68
    // Predicated region
    $region10: #{tpu_custom_call.1} parent=1 // pred_check
      _
    $region11: #{tpu_custom_call.1} parent=1 // pred_check_branch
      %72 = sbr.rel (0) target = $region13
    $region12: #{tpu_custom_call.1} parent=1 // pred_region
      %s74 = ssub.s32 256, 256
      %75 = vsyncadd [#allocation6], %s74
      %s76 = sshll.u32 [#allocation7], 4
      %s77 = int_to_ptr.vmem [resolvable:$true] %s76
      %82 = dma.vmem_to_hbm [thread:$0]  %s77, 256, %s2, [#allocation6], 128, 128, 8
    $region13: #{tpu_custom_call.1} parent=1 // pred_fallthru
      _
    // Predicated region
    $region14: #{tpu_custom_call.1} parent=1 // pred_check
      _
    $region15: #{tpu_custom_call.1} parent=1 // pred_check_branch
      %84 = sbr.rel (0) target = $region17
    $region16: #{tpu_custom_call.1} parent=1 // pred_region
      %85 = dma.done [#allocation6], 256
    $region17: #{tpu_custom_call.1} parent=1 // pred_fallthru
      _
    %86 = vsyncpa [#allocation5], 1
    %87 = vsyncpa [#allocation6], 1

</llo_original>
